<compile_context>
chip_gen: v6e
topology: v6e:2x2x1
jax: 0.10.0
libtpu: 0.0.40
codegen_flags: <defaults>
</compile_context>

<pallas_src>
import jax
import jax.numpy as jnp
from jax import lax
from jax.experimental import pallas as pl
from jax.experimental.pallas import tpu as pltpu

LN_EPS = 1e-5  # PyTorch LayerNorm default


def _round_up(a, b):
    return ((a + b - 1) // b) * b


def _cdiv(a, b):
    return (a + b - 1) // b


def _vmem_budget_bytes():
    """~80% of this generation's physical VMEM; falls back to the v7x 64 MiB floor."""
    try:
        cap = int(pltpu.get_tpu_info().vmem_capacity_bytes)
    except Exception:  # pragma: no cover - older jax / CPU tracing fallback
        cap = 64 * 1024 * 1024
    return int(0.8 * cap)


# ----------------------------------------------------------------------------
# One-time (init) parameter packing.  Do NOT redo this per forward call.
# ----------------------------------------------------------------------------
def prepare_params(w, b, gamma, beta, *, use_bf16_matmul=False):
    """Pad H to a lane-dense multiple of 128 with exactly-zero padded columns
    (keeps LayerNorm statistics exact) and optionally cast the weight to bf16.

    w: [D_in, H] (PyTorch Linear weight transposed), b/gamma/beta: [H].
    """
    d_in, h = w.shape
    h_pad = _round_up(h, 128)
    b2 = b.reshape(1, h).astype(jnp.float32)
    g2 = gamma.reshape(1, h).astype(jnp.float32)
    beta2 = beta.reshape(1, h).astype(jnp.float32)
    if h_pad != h:
        pad = ((0, 0), (0, h_pad - h))
        w = jnp.pad(w, pad)
        b2 = jnp.pad(b2, pad)
        g2 = jnp.pad(g2, pad)
        beta2 = jnp.pad(beta2, pad)
    if use_bf16_matmul:
        w = w.astype(jnp.bfloat16)
    else:
        w = w.astype(jnp.float32)
    return {"w": w, "b": b2, "gamma": g2, "beta": beta2, "h": int(h)}


# ----------------------------------------------------------------------------
# Kernels
# ----------------------------------------------------------------------------
def _layernorm_relu(h, g, beta, h_real, h_pad):
    """f32 LayerNorm (over the real H columns) + affine + ReLU."""
    inv_h = 1.0 / float(h_real)
    mean = jnp.sum(h, axis=-1, keepdims=True) * inv_h
    d = h - mean
    if h_pad != h_real:
        # Padded columns of h are exactly 0, but (h - mean) is not: mask them so
        # the variance reduction only sees the real hidden columns.
        col = lax.broadcasted_iota(jnp.int32, (1, h_pad), 1)
        d = jnp.where(col < h_real, d, 0.0)
    var = jnp.sum(d * d, axis=-1, keepdims=True) * inv_h
    hn = d * lax.rsqrt(var + LN_EPS)
    y = hn * g + beta  # padded gamma/beta are 0 -> padded output columns stay 0
    return jnp.maximum(y, 0.0)


def make_fused_kernel(h_real, h_pad):
    """Single-K path: the (D_in, H_pad) weight is resident in VMEM."""

    def kernel(x_ref, w_ref, b_ref, g_ref, beta_ref, o_ref):
        xb = x_ref[...]
        if xb.dtype != w_ref.dtype:
            xb = xb.astype(w_ref.dtype)  # bf16 MXU path: cast on the VPU, f32 in HBM
        h = jnp.dot(xb, w_ref[...], preferred_element_type=jnp.float32)
        h = h + b_ref[...]
        y = _layernorm_relu(h, g_ref[...], beta_ref[...], h_real, h_pad)
        o_ref[...] = y.astype(o_ref.dtype)

    return kernel


def make_ktiled_kernel(h_real, h_pad):
    """K-tiled path: weight streamed in (tk, H_pad) chunks, f32 VMEM accumulator."""

    def kernel(x_ref, w_ref, b_ref, g_ref, beta_ref, o_ref, acc_ref):
        k = pl.program_id(1)

        @pl.when(k == 0)
        def _():
            acc_ref[...] = jnp.zeros_like(acc_ref)

        xb = x_ref[...]
        if xb.dtype != w_ref.dtype:
            xb = xb.astype(w_ref.dtype)
        acc_ref[...] += jnp.dot(xb, w_ref[...], preferred_element_type=jnp.float32)

        @pl.when(k == pl.num_programs(1) - 1)
        def _():
            h = acc_ref[...] + b_ref[...]
            y = _layernorm_relu(h, g_ref[...], beta_ref[...], h_real, h_pad)
            o_ref[...] = y.astype(o_ref.dtype)

    return kernel


# ----------------------------------------------------------------------------
# Wrapper
# ----------------------------------------------------------------------------
def mlp_forward(x, params, *, tm=512, out_dtype=jnp.float32, force_k_tiles=None):
    """x: [B, N, D_in] float32 -> [B, N, H] out_dtype.

    `params` comes from prepare_params() (padding / casts already done at init).
    """
    w, b, g, beta = params["w"], params["b"], params["gamma"], params["beta"]
    h_real = params["h"]
    B, N, d_in = x.shape
    assert w.shape[0] == d_in, "weight/input D_in mismatch"
    h_pad = w.shape[1]
    M = B * N
    x2 = x.reshape(M, d_in)

    x_itemsize = jnp.dtype(x.dtype).itemsize
    w_itemsize = jnp.dtype(w.dtype).itemsize
    out_itemsize = jnp.dtype(out_dtype).itemsize

    budget = _vmem_budget_bytes()
    row_align = 16 if out_itemsize < 4 else 8  # bf16 output packs 2 rows / sublane

    # ---- row tile sizing -----------------------------------------------------
    tm_eff = max(row_align, min(_round_up(tm, row_align), _round_up(M, row_align)))
    # Ensure >= 2 grid steps over rows when possible so both v7x TCs get work.
    if _cdiv(M, tm_eff) < 2 and M > row_align:
        tm_eff = _round_up(_cdiv(M, 2), row_align)

    def vmem_need_single(tm_):
        return (2 * tm_ * d_in * x_itemsize            # double-buffered x tiles
                + d_in * h_pad * w_itemsize            # resident weight (single-buffered)
                + 2 * tm_ * h_pad * out_itemsize       # double-buffered out tiles
                + 3 * h_pad * 4                        # bias / gamma / beta
                + (1 << 20))                           # headroom for compiler scratch

    def vmem_need_ktiled(tm_, tk_):
        return (2 * tm_ * tk_ * x_itemsize
                + 2 * tk_ * h_pad * w_itemsize
                + 2 * tm_ * h_pad * out_itemsize
                + tm_ * h_pad * 4                      # f32 accumulator scratch
                + 3 * h_pad * 4
                + (1 << 20))

    # ---- path selection ------------------------------------------------------
    use_ktiled = force_k_tiles is not None
    tk = None
    if use_ktiled:
        nk = int(force_k_tiles)
        if d_in % nk != 0:
            raise ValueError("force_k_tiles must divide D_in")
        tk = d_in // nk
        if tk != d_in and tk % 128 != 0:
            raise ValueError("K tile must be a multiple of 128 (or the full D_in)")
    else:
        while tm_eff > row_align and vmem_need_single(tm_eff) > budget:
            tm_eff = _round_up(tm_eff // 2, row_align)
        if vmem_need_single(tm_eff) > budget:
            # Resident weight does not fit (e.g. v7x 64 MiB VMEM): stream it along K.
            for cand in (1024, 512, 256, 128):
                if d_in % cand == 0:
                    tk = cand
                    break
            if tk is None:
                # TODO(synk): pad D_in (and x) at init to enable K tiling for input
                # sizes that are not multiples of 128; fall back to resident weight.
                tk = None
            else:
                use_ktiled = True

    if use_ktiled:
        while tm_eff > row_align and vmem_need_ktiled(tm_eff, tk) > budget:
            tm_eff = _round_up(tm_eff // 2, row_align)

    M_pad = _round_up(M, tm_eff)
    if M_pad != M:
        x2 = jnp.pad(x2, ((0, M_pad - M), (0, 0)))
    grid_m = M_pad // tm_eff

    cost = pl.CostEstimate(
        flops=2 * M_pad * d_in * h_pad,
        transcendentals=M_pad,  # one rsqrt per row
        bytes_accessed=(M_pad * d_in * x_itemsize
                        + d_in * h_pad * w_itemsize
                        + M_pad * h_pad * out_itemsize),
    )

    if not use_ktiled:
        kernel = make_fused_kernel(h_real, h_pad)
        grid = (grid_m,)
        dims = ("parallel",)

        def const_spec(shape):
            return pl.BlockSpec(shape, lambda i: (0, 0), pipeline_mode=pl.Buffered(1))

        in_specs = [
            pl.BlockSpec((tm_eff, d_in), lambda i: (i, 0)),     # x row tile
            const_spec((d_in, h_pad)),                          # weight (resident)
            const_spec((1, h_pad)),                             # bias
            const_spec((1, h_pad)),                             # LN gamma
            const_spec((1, h_pad)),                             # LN beta
        ]
        out_specs = pl.BlockSpec((tm_eff, h_pad), lambda i: (i, 0))
        scratch = []
    else:
        kernel = make_ktiled_kernel(h_real, h_pad)
        grid = (grid_m, d_in // tk)
        dims = ("parallel", "arbitrary")

        def const_spec2(shape):
            return pl.BlockSpec(shape, lambda i, k: (0, 0), pipeline_mode=pl.Buffered(1))

        in_specs = [
            pl.BlockSpec((tm_eff, tk), lambda i, k: (i, k)),    # x (row, K) tile
            pl.BlockSpec((tk, h_pad), lambda i, k: (k, 0)),     # weight K slab (streamed)
            const_spec2((1, h_pad)),                            # bias
            const_spec2((1, h_pad)),                            # LN gamma
            const_spec2((1, h_pad)),                            # LN beta
        ]
        out_specs = pl.BlockSpec((tm_eff, h_pad), lambda i, k: (i, 0))
        scratch = [pltpu.VMEM((tm_eff, h_pad), jnp.float32)]

    out2 = pl.pallas_call(
        kernel,
        out_shape=jax.ShapeDtypeStruct((M_pad, h_pad), out_dtype),
        grid_spec=pltpu.PrefetchScalarGridSpec(
            num_scalar_prefetch=0,
            grid=grid,
            in_specs=in_specs,
            out_specs=out_specs,
            scratch_shapes=scratch,
        ),
        compiler_params=pltpu.CompilerParams(
            dimension_semantics=dims,
            vmem_limit_bytes=budget,
        ),
        cost_estimate=cost,
    )(x2, w, b, g, beta)

    if M_pad != M or h_pad != h_real:
        out2 = out2[:M, :h_real]
    return out2.reshape(B, N, h_real)


# ----------------------------------------------------------------------------
# Reference & self-test
# ----------------------------------------------------------------------------
def reference_forward(x, w, b, gamma, beta):
    h = jnp.einsum("bnd,dh->bnh", x, w) + b
    mean = jnp.mean(h, axis=-1, keepdims=True)
    var = jnp.mean((h - mean) ** 2, axis=-1, keepdims=True)
    hn = (h - mean) / jnp.sqrt(var + LN_EPS)
    return jnp.maximum(hn * gamma + beta, 0.0)


if __name__ == "__main__":
    # Shapes consistent with the module: x.shape = [batch, n, input_size]
    batch, n, input_size, hidden_size = 2, 8, 32, 64

    key = jax.random.PRNGKey(0)
    kx, kw, kb = jax.random.split(key, 3)

    x = jax.random.normal(kx, (batch, n, input_size), dtype=jnp.float32)
    bound = float(input_size) ** -0.5
    w = jax.random.uniform(kw, (input_size, hidden_size), jnp.float32, -bound, bound)
    b = jax.random.uniform(kb, (hidden_size,), jnp.float32, -bound, bound)
    gamma = jnp.ones((hidden_size,), jnp.float32)   # LayerNorm default init
    beta = jnp.zeros((hidden_size,), jnp.float32)

    # 1) Default f32 path (resident weight).
    params = prepare_params(w, b, gamma, beta)               # one-time init cost
    out = mlp_forward(x, params)
    jax.block_until_ready(out)
    ref = reference_forward(x, w, b, gamma, beta)
    assert out.shape == (batch, n, hidden_size)
    assert jnp.allclose(out, ref, atol=1e-5, rtol=1e-5)

    # 2) bf16 MXU inputs + bf16 output (loose tolerance; LN math stays f32).
    params_bf = prepare_params(w, b, gamma, beta, use_bf16_matmul=True)
    out_bf = mlp_forward(x, params_bf, out_dtype=jnp.bfloat16)
    jax.block_until_ready(out_bf)
    assert jnp.allclose(out_bf.astype(jnp.float32), ref, atol=1e-1, rtol=0.0)

    # 3) K-tiled (streamed-weight) path used when the weight exceeds the VMEM budget.
    d2, h2 = 256, 128
    k2x, k2w, k2b = jax.random.split(jax.random.PRNGKey(1), 3)
    x2 = jax.random.normal(k2x, (batch, n, d2), dtype=jnp.float32)
    bound2 = float(d2) ** -0.5
    w2 = jax.random.uniform(k2w, (d2, h2), jnp.float32, -bound2, bound2)
    b2 = jax.random.uniform(k2b, (h2,), jnp.float32, -bound2, bound2)
    g2 = jnp.ones((h2,), jnp.float32)
    be2 = jnp.zeros((h2,), jnp.float32)
    params2 = prepare_params(w2, b2, g2, be2)
    out2 = mlp_forward(x2, params2, force_k_tiles=2)
    jax.block_until_ready(out2)
    ref2 = reference_forward(x2, w2, b2, g2, be2)
    assert out2.shape == (batch, n, h2)
    assert jnp.allclose(out2, ref2, atol=1e-4, rtol=1e-4)

    print("KERNEL_OK")
</pallas_src>

<mosaic_0001>
module attributes {stable_mosaic.version = 11 : i64} {
  func.func @kernel(%arg0: i32, %arg1: memref<8x32xf32, #tpu.memory_space<vmem>>, %arg2: memref<32x128xf32, #tpu.memory_space<vmem>>, %arg3: memref<1x128xf32, #tpu.memory_space<vmem>>, %arg4: memref<1x128xf32, #tpu.memory_space<vmem>>, %arg5: memref<1x128xf32, #tpu.memory_space<vmem>>, %arg6: memref<8x128xf32, #tpu.memory_space<vmem>>) attributes {dimension_semantics = [#tpu.dimension_semantics<parallel>], iteration_bounds = array<i64: 2>, scalar_prefetch = 0 : i64, scratch_operands = 0 : i64, tpu.core_type = #tpu.core_type<tc>, window_params = [{transform_indices = @transform_0, window_bounds = array<i64: 8, 32>}, {pipeline_mode = #tpu.pipeline_mode<synchronous>, transform_indices = @transform_1, window_bounds = array<i64: 32, 128>}, {pipeline_mode = #tpu.pipeline_mode<synchronous>, transform_indices = @transform_2, window_bounds = array<i64: 1, 128>}, {pipeline_mode = #tpu.pipeline_mode<synchronous>, transform_indices = @transform_3, window_bounds = array<i64: 1, 128>}, {pipeline_mode = #tpu.pipeline_mode<synchronous>, transform_indices = @transform_4, window_bounds = array<i64: 1, 128>}, {transform_indices = @transform_5, window_bounds = array<i64: 8, 128>}]} {
    %c0 = arith.constant 0 : index
    %c0_0 = arith.constant 0 : index
    %0 = vector.load %arg1[%c0, %c0_0] : memref<8x32xf32, #tpu.memory_space<vmem>>, vector<8x32xf32>
    %c0_1 = arith.constant 0 : index
    %c0_2 = arith.constant 0 : index
    %1 = vector.load %arg2[%c0_1, %c0_2] : memref<32x128xf32, #tpu.memory_space<vmem>>, vector<32x128xf32>
    %cst = arith.constant dense<0.000000e+00> : vector<8x128xf32>
    %2 = tpu.matmul %0, %1, %cst {dimension_numbers = #tpu.dot_dimension_numbers<[1], [0], [0], [1], [0, 0, 1, 1], [], []>} : vector<8x32xf32>, vector<32x128xf32>, vector<8x128xf32> -> vector<8x128xf32>
    %c0_3 = arith.constant 0 : index
    %c0_4 = arith.constant 0 : index
    %3 = vector.load %arg3[%c0_3, %c0_4] : memref<1x128xf32, #tpu.memory_space<vmem>>, vector<1x128xf32>
    %4 = vector.broadcast %3 : vector<1x128xf32> to vector<8x128xf32>
    %5 = arith.addf %2, %4 : vector<8x128xf32>
    %c0_5 = arith.constant 0 : index
    %c0_6 = arith.constant 0 : index
    %6 = vector.load %arg4[%c0_5, %c0_6] : memref<1x128xf32, #tpu.memory_space<vmem>>, vector<1x128xf32>
    %c0_7 = arith.constant 0 : index
    %c0_8 = arith.constant 0 : index
    %7 = vector.load %arg5[%c0_7, %c0_8] : memref<1x128xf32, #tpu.memory_space<vmem>>, vector<1x128xf32>
    %cst_9 = arith.constant dense<0.000000e+00> : vector<8xf32>
    %8 = vector.multi_reduction <add>, %5, %cst_9 [1] : vector<8x128xf32> to vector<8xf32>
    %9 = vector.shape_cast %8 : vector<8xf32> to vector<8x1xf32>
    %cst_10 = arith.constant 1.562500e-02 : f32
    %10 = vector.broadcast %cst_10 : f32 to vector<8x1xf32>
    %11 = arith.mulf %9, %10 : vector<8x1xf32>
    %12 = vector.broadcast %11 : vector<8x1xf32> to vector<8x128xf32>
    %13 = arith.subf %5, %12 : vector<8x128xf32>
    %14 = tpu.iota {dimensions = array<i32: 1>} : vector<1x128xi32>
    %c64_i32 = arith.constant 64 : i32
    %15 = vector.broadcast %c64_i32 : i32 to vector<1x128xi32>
    %16 = arith.cmpi slt, %14, %15 : vector<1x128xi32>
    %cst_11 = arith.constant 0.000000e+00 : f32
    %17 = vector.shape_cast %16 : vector<1x128xi1> to vector<1x128xi1>
    %18 = vector.broadcast %17 : vector<1x128xi1> to vector<8x128xi1>
    %19 = vector.broadcast %cst_11 : f32 to vector<8x128xf32>
    %20 = arith.select %18, %13, %19 : vector<8x128xi1>, vector<8x128xf32>
    %21 = arith.mulf %20, %20 : vector<8x128xf32>
    %cst_12 = arith.constant dense<0.000000e+00> : vector<8xf32>
    %22 = vector.multi_reduction <add>, %21, %cst_12 [1] : vector<8x128xf32> to vector<8xf32>
    %23 = vector.shape_cast %22 : vector<8xf32> to vector<8x1xf32>
    %cst_13 = arith.constant 1.562500e-02 : f32
    %24 = vector.broadcast %cst_13 : f32 to vector<8x1xf32>
    %25 = arith.mulf %23, %24 : vector<8x1xf32>
    %cst_14 = arith.constant 9.99999974E-6 : f32
    %26 = vector.broadcast %cst_14 : f32 to vector<8x1xf32>
    %27 = arith.addf %25, %26 : vector<8x1xf32>
    %28 = math.rsqrt %27 : vector<8x1xf32>
    %29 = vector.broadcast %28 : vector<8x1xf32> to vector<8x128xf32>
    %30 = arith.mulf %20, %29 : vector<8x128xf32>
    %31 = vector.broadcast %6 : vector<1x128xf32> to vector<8x128xf32>
    %32 = arith.mulf %30, %31 : vector<8x128xf32>
    %33 = vector.broadcast %7 : vector<1x128xf32> to vector<8x128xf32>
    %34 = arith.addf %32, %33 : vector<8x128xf32>
    %cst_15 = arith.constant 0.000000e+00 : f32
    %35 = vector.broadcast %cst_15 : f32 to vector<8x128xf32>
    %36 = arith.maximumf %34, %35 : vector<8x128xf32>
    %c0_16 = arith.constant 0 : index
    %c0_17 = arith.constant 0 : index
    %37 = vector.load %arg6[%c0_16, %c0_17] : memref<8x128xf32, #tpu.memory_space<vmem>>, vector<8x128xf32>
    tpu.vector_store %arg6[%c0_16, %c0_17], %36 {strides = array<i32>} : memref<8x128xf32, #tpu.memory_space<vmem>>, vector<8x128xf32>,
    return
  }
  func.func @transform_0(%arg0: i32) -> (i32, i32) {
    %c0_i32 = arith.constant 0 : i32
    %c0_i32_0 = arith.constant 0 : i32
    return %arg0, %c0_i32 : i32, i32
  }
  func.func @transform_1(%arg0: i32) -> (i32, i32) {
    %c0_i32 = arith.constant 0 : i32
    %c0_i32_0 = arith.constant 0 : i32
    %c0_i32_1 = arith.constant 0 : i32
    return %c0_i32, %c0_i32_0 : i32, i32
  }
  func.func @transform_2(%arg0: i32) -> (i32, i32) {
    %c0_i32 = arith.constant 0 : i32
    %c0_i32_0 = arith.constant 0 : i32
    %c0_i32_1 = arith.constant 0 : i32
    return %c0_i32, %c0_i32_0 : i32, i32
  }
  func.func @transform_3(%arg0: i32) -> (i32, i32) {
    %c0_i32 = arith.constant 0 : i32
    %c0_i32_0 = arith.constant 0 : i32
    %c0_i32_1 = arith.constant 0 : i32
    return %c0_i32, %c0_i32_0 : i32, i32
  }
  func.func @transform_4(%arg0: i32) -> (i32, i32) {
    %c0_i32 = arith.constant 0 : i32
    %c0_i32_0 = arith.constant 0 : i32
    %c0_i32_1 = arith.constant 0 : i32
    return %c0_i32, %c0_i32_0 : i32, i32
  }
  func.func @transform_5(%arg0: i32) -> (i32, i32) {
    %c0_i32 = arith.constant 0 : i32
    %c0_i32_0 = arith.constant 0 : i32
    return %arg0, %c0_i32 : i32, i32
  }
}

</mosaic_0001>

<llo_original>
// kernel: tpu_custom_call.1
$region0: #{tpu_custom_call.1}
  #allocation0 [shape = 'u32[]', space=smem, size = 0x4, offset = 0x4, fixed_abs, tag = 'smem constant byte address 0x4 - core index']
  #allocation1 [shape = 'u32[144,128]{1,0:T(1,128)}', space=vmem, size = 0x12000, scoped, tag = 'internal scratch']
  %s0 = inlined_call_operand.hbm [shape: f32[16,32], index: 0, kind: input, shape index: {}]
  %s1 = inlined_call_operand.hbm [shape: f32[32,128], index: 1, kind: input, shape index: {}]
  %s2 = inlined_call_operand.vmem [shape: f32[1,128], index: 2, kind: input, shape index: {}]
  %s3 = inlined_call_operand.vmem [shape: f32[1,128], index: 3, kind: input, shape index: {}]
  %s4 = inlined_call_operand.vmem [shape: f32[1,128], index: 4, kind: input, shape index: {}]
  %s5 = inlined_call_operand.hbm [shape: f32[16,128], index: 5, kind: output, shape index: {}]
  %s6 = sld [smem:[#allocation0]]
  $region61: #{tpu_custom_call.1} parent=0
    _
  %s8 = ssub.s32 1, %s6
  %s9 = scalar_select 0, %s8, %s6
  $region1: #{tpu_custom_call.1} parent=0
    #allocation2 [shape = 'u8[8192]{0}', space=vmem, size = 0x2000, scoped, tag = 'input window, operand 0']
    #allocation3 [shape = 's32[2]{0}', space=sflag, size = 0x8, scoped, tag = 'scoped memory for tpu_custom_call.1']
    #allocation4 [shape = 's32[2]{0}', space=sflag, size = 0x8, scoped, tag = 'scoped memory for tpu_custom_call.1']
    #allocation5 [shape = 'u8[16384]{0}', space=vmem, size = 0x4000, scoped, tag = 'input window, operand 1, single buffered']
    #allocation6 [shape = 's32[1]{0}', space=sflag, size = 0x4, scoped, tag = 'scoped memory for tpu_custom_call.1']
    #allocation7 [shape = 'u8[8192]{0}', space=vmem, size = 0x2000, scoped, tag = 'output window, operand 0']
    %10 = vsyncpa [#allocation3], 0
    %s11 = scalar_lea.sflag [#allocation3], 1
    %12 = vsyncpa %s11, 0
    %13 = vsyncpa [#allocation6], 0
    %14 = vsyncpa [#allocation4], 0
    %s15 = scalar_lea.sflag [#allocation4], 1
    %16 = vsyncpa %s15, 0
    loop: start=0, step=1, limit=4
    $region2: #{tpu_custom_call.1} parent=1 // loop_pre_header
      _
    $region3: #{tpu_custom_call.1} parent=1 // loop_header
      %s18 = sphi 0, %s22
      %p19 = scmp.ge.s32.totalorder %s18, 4
      %s28 = sphi 0, %s30
      %s31 = sphi 0, %s28
      %s32 = sphi 0, %s31
      %s48 = sphi 0, %s32
      %s52 = sphi 0, %s52
      %s54 = sphi 0, %s52
      %s55 = sphi 0, %s54
      %s69 = sphi 0, %s55
      %s73 = sphi 0, %s73
      %s75 = sphi 0, %s73
      %s76 = sphi 0, %s75
      %s90 = sphi 0, %s76
      %s94 = sphi 0, %s94
      %s96 = sphi 0, %s94
      %s97 = sphi 0, %s96
      %s111 = sphi 0, %s97
      %s115 = sphi 0, %s115
      %s117 = sphi 0, %s115
      %s118 = sphi 0, %s117
      %s132 = sphi 0, %s118
      %s138 = sphi 0, %s140
      %s141 = sphi 0, %s138
      %s142 = sphi 0, %s141
      %s158 = sphi 0, %s142
    $region4: #{tpu_custom_call.1} parent=1 // loop_header_branch
      %21 = sbr.rel (%p19) target = $region8
    $region5: #{tpu_custom_call.1} parent=1 // loop_body
      %s23 = ssub.s32 %s18, 1
      %s24 = ssub.s32 %s18, 2
      %s25 = sadd.s32 %s18, 1
      %s26 = ssub.s32 %s18, %s25
      %p27 = scmp.eq.s32.totalorder %s26, 0
      %s29 = sadd.s32 %s28, 1
      %s30 = scalar_select %p27, %s28, %s29
      %p33 = pneg %p27
      %p34 = scmp.eq.s32.totalorder %s18, 1
      %p35 = por %p33, %p34
      %p36 = scmp.ne.s32.totalorder %s28, %s31
      %p37 = scmp.eq.s32.totalorder %s18, 0
      %p38 = por %p36, %p37
      %p39 = scmp.ne.s32.totalorder %s28, %s31
      %p40 = scmp.eq.s32.totalorder %s23, 1
      %p41 = por %p39, %p40
      %p42 = scmp.ne.s32.totalorder %s31, %s32
      %p43 = scmp.eq.s32.totalorder %s23, 0
      %p44 = por %p42, %p43
      %p45 = scmp.ne.s32.totalorder %s31, %s32
      %p46 = scmp.eq.s32.totalorder %s24, 1
      %p47 = por %p45, %p46
      %p49 = scmp.ne.s32.totalorder %s32, %s48
      %p50 = scmp.eq.s32.totalorder %s24, 0
      %p51 = por %p49, %p50
      %s53 = sadd.s32 %s52, 1
      %p56 = scmp.eq.s32.totalorder %s18, 1
      %p57 = scmp.ne.s32.totalorder %s52, %s54
      %p58 = scmp.eq.s32.totalorder %s18, 0
      %p59 = por %p57, %p58
      %p60 = scmp.ne.s32.totalorder %s52, %s54
      %p61 = scmp.eq.s32.totalorder %s23, 1
      %p62 = por %p60, %p61
      %p63 = scmp.ne.s32.totalorder %s54, %s55
      %p64 = scmp.eq.s32.totalorder %s23, 0
      %p65 = por %p63, %p64
      %p66 = scmp.ne.s32.totalorder %s54, %s55
      %p67 = scmp.eq.s32.totalorder %s24, 1
      %p68 = por %p66, %p67
      %p70 = scmp.ne.s32.totalorder %s55, %s69
      %p71 = scmp.eq.s32.totalorder %s24, 0
      %p72 = por %p70, %p71
      %s74 = sadd.s32 %s73, 1
      %p77 = scmp.eq.s32.totalorder %s18, 1
      %p78 = scmp.ne.s32.totalorder %s73, %s75
      %p79 = scmp.eq.s32.totalorder %s18, 0
      %p80 = por %p78, %p79
      %p81 = scmp.ne.s32.totalorder %s73, %s75
      %p82 = scmp.eq.s32.totalorder %s23, 1
      %p83 = por %p81, %p82
      %p84 = scmp.ne.s32.totalorder %s75, %s76
      %p85 = scmp.eq.s32.totalorder %s23, 0
      %p86 = por %p84, %p85
      %p87 = scmp.ne.s32.totalorder %s75, %s76
      %p88 = scmp.eq.s32.totalorder %s24, 1
      %p89 = por %p87, %p88
      %p91 = scmp.ne.s32.totalorder %s76, %s90
      %p92 = scmp.eq.s32.totalorder %s24, 0
      %p93 = por %p91, %p92
      %s95 = sadd.s32 %s94, 1
      %p98 = scmp.eq.s32.totalorder %s18, 1
      %p99 = scmp.ne.s32.totalorder %s94, %s96
      %p100 = scmp.eq.s32.totalorder %s18, 0
      %p101 = por %p99, %p100
      %p102 = scmp.ne.s32.totalorder %s94, %s96
      %p103 = scmp.eq.s32.totalorder %s23, 1
      %p104 = por %p102, %p103
      %p105 = scmp.ne.s32.totalorder %s96, %s97
      %p106 = scmp.eq.s32.totalorder %s23, 0
      %p107 = por %p105, %p106
      %p108 = scmp.ne.s32.totalorder %s96, %s97
      %p109 = scmp.eq.s32.totalorder %s24, 1
      %p110 = por %p108, %p109
      %p112 = scmp.ne.s32.totalorder %s97, %s111
      %p113 = scmp.eq.s32.totalorder %s24, 0
      %p114 = por %p112, %p113
      %s116 = sadd.s32 %s115, 1
      %p119 = scmp.eq.s32.totalorder %s18, 1
      %p120 = scmp.ne.s32.totalorder %s115, %s117
      %p121 = scmp.eq.s32.totalorder %s18, 0
      %p122 = por %p120, %p121
      %p123 = scmp.ne.s32.totalorder %s115, %s117
      %p124 = scmp.eq.s32.totalorder %s23, 1
      %p125 = por %p123, %p124
      %p126 = scmp.ne.s32.totalorder %s117, %s118
      %p127 = scmp.eq.s32.totalorder %s23, 0
      %p128 = por %p126, %p127
      %p129 = scmp.ne.s32.totalorder %s117, %s118
      %p130 = scmp.eq.s32.totalorder %s24, 1
      %p131 = por %p129, %p130
      %p133 = scmp.ne.s32.totalorder %s118, %s132
      %p134 = scmp.eq.s32.totalorder %s24, 0
      %p135 = por %p133, %p134
      %s136 = ssub.s32 %s18, %s25
      %p137 = scmp.eq.s32.totalorder %s136, 0
      %s139 = sadd.s32 %s138, 1
      %s140 = scalar_select %p137, %s138, %s139
      %p143 = pneg %p137
      %p144 = scmp.eq.s32.totalorder %s18, 1
      %p145 = por %p143, %p144
      %p146 = scmp.ne.s32.totalorder %s138, %s141
      %p147 = scmp.eq.s32.totalorder %s18, 0
      %p148 = por %p146, %p147
      %p149 = scmp.ne.s32.totalorder %s138, %s141
      %p150 = scmp.eq.s32.totalorder %s23, 1
      %p151 = por %p149, %p150
      %p152 = scmp.ne.s32.totalorder %s141, %s142
      %p153 = scmp.eq.s32.totalorder %s23, 0
      %p154 = por %p152, %p153
      %p155 = scmp.ne.s32.totalorder %s141, %s142
      %p156 = scmp.eq.s32.totalorder %s24, 1
      %p157 = por %p155, %p156
      %p159 = scmp.ne.s32.totalorder %s142, %s158
      %p160 = scmp.eq.s32.totalorder %s24, 0
      %p161 = por %p159, %p160
      %p162 = scmp.le.s32.totalorder 1, %s18
      %p163 = scmp.lt.s32.totalorder %s18, 3
      %p164 = pnand %p162, %p163
      %p165 = pneg %p164
      // Predicated region
      $region9: #{tpu_custom_call.1} parent=5 // pred_check
        _
      $region10: #{tpu_custom_call.1} parent=5 // pred_check_branch
        %167 = sbr.rel (%p164) target = $region12
      $region11: #{tpu_custom_call.1} parent=5 // pred_region
        %s168 = ssub.s32 %s18, 1
        // Predicated region
        $region13: #{tpu_custom_call.1} parent=11 // pred_check
          %p169 = pneg %p65
        $region14: #{tpu_custom_call.1} parent=11 // pred_check_branch
          %171 = sbr.rel (%p169) target = $region16
        $region15: #{tpu_custom_call.1} parent=11 // pred_region
          %s173 = ssub.s32 512, 512
          %174 = vsyncadd [#allocation6], %s173
          %s175 = sshll.u32 [#allocation5], 4
          %s176 = int_to_ptr.vmem [resolvable:$true] %s175
          %181 = dma.hbm_to_vmem [thread:$0]  %s1, 512, %s176, [#allocation6], 128, 128, 8
        $region16: #{tpu_custom_call.1} parent=11 // pred_fallthru
          _
        // Predicated region
        $region17: #{tpu_custom_call.1} parent=11 // pred_check
          %p182 = pneg %p86
        $region18: #{tpu_custom_call.1} parent=11 // pred_check_branch
          %184 = sbr.rel (%p182) target = $region20
        $region19: #{tpu_custom_call.1} parent=11 // pred_region
          _
        $region20: #{tpu_custom_call.1} parent=11 // pred_fallthru
          _
        // Predicated region
        $region21: #{tpu_custom_call.1} parent=11 // pred_check
          %p185 = pneg %p107
        $region22: #{tpu_custom_call.1} parent=11 // pred_check_branch
          %187 = sbr.rel (%p185) target = $region24
        $region23: #{tpu_custom_call.1} parent=11 // pred_region
          _
        $region24: #{tpu_custom_call.1} parent=11 // pred_fallthru
          _
        // Predicated region
        $region25: #{tpu_custom_call.1} parent=11 // pred_check
          %p188 = pneg %p128
        $region26: #{tpu_custom_call.1} parent=11 // pred_check_branch
          %190 = sbr.rel (%p188) target = $region28
        $region27: #{tpu_custom_call.1} parent=11 // pred_region
          _
        $region28: #{tpu_custom_call.1} parent=11 // pred_fallthru
          _
      $region12: #{tpu_custom_call.1} parent=5 // pred_fallthru
        _
      %p191 = scmp.lt.s32.totalorder %s18, 2
      // Predicated region
      $region29: #{tpu_custom_call.1} parent=5 // pred_check
        %p192 = pneg %p191
      $region30: #{tpu_custom_call.1} parent=5 // pred_check_branch
        %194 = sbr.rel (%p192) target = $region32
      $region31: #{tpu_custom_call.1} parent=5 // pred_region
        // Predicated region
        $region33: #{tpu_custom_call.1} parent=31 // pred_check
          %p195 = pneg %p38
        $region34: #{tpu_custom_call.1} parent=31 // pred_check_branch
          %197 = sbr.rel (%p195) target = $region36
        $region35: #{tpu_custom_call.1} parent=31 // pred_region
          %s198 = sand.u32 %s28, 1
          %s199 = scalar_lea.sflag [#allocation3], %s198
          %s200 = sand.u32 %s28, 1
          %s201 = smul.addr %s200, 8
          %s202 = scalar_lea.vmem [#allocation2], %s201
          %s204 = ssub.s32 128, 128
          %205 = vsyncadd %s199, %s204
          %s206 = smul.addr %s18, 128
          %s207 = scalar_lea.hbm %s0, %s206
          %s209 = sshll.u32 %s202, 4
          %s210 = int_to_ptr.vmem [resolvable:$true] %s209
          %212 = dma.hbm_to_vmem [thread:$0]  %s207, 128, %s210, %s199
        $region36: #{tpu_custom_call.1} parent=31 // pred_fallthru
          _
      $region32: #{tpu_custom_call.1} parent=5 // pred_fallthru
        _
      %p213 = scmp.le.s32.totalorder 1, %s18
      %p214 = scmp.lt.s32.totalorder %s18, 3
      %p215 = pnand %p213, %p214
      %p216 = pneg %p215
      // Predicated region
      $region37: #{tpu_custom_call.1} parent=5 // pred_check
        _
      $region38: #{tpu_custom_call.1} parent=5 // pred_check_branch
        %218 = sbr.rel (%p215) target = $region40
      $region39: #{tpu_custom_call.1} parent=5 // pred_region
        %s219 = ssub.s32 %s18, 1
        %s220 = sand.u32 %s31, 1
        %s221 = scalar_lea.sflag [#allocation3], %s220
        %s222 = sand.u32 %s31, 1
        %s223 = smul.addr %s222, 8
        %s224 = scalar_lea.vmem [#allocation2], %s223
        // Predicated region
        $region41: #{tpu_custom_call.1} parent=39 // pred_check
          %p225 = pneg %p44
        $region42: #{tpu_custom_call.1} parent=39 // pred_check_branch
          %227 = sbr.rel (%p225) target = $region44
        $region43: #{tpu_custom_call.1} parent=39 // pred_region
          %228 = dma.done %s221, 128
        $region44: #{tpu_custom_call.1} parent=39 // pred_fallthru
          _
        // Predicated region
        $region45: #{tpu_custom_call.1} parent=39 // pred_check
          %p229 = pneg %p65
        $region46: #{tpu_custom_call.1} parent=39 // pred_check_branch
          %231 = sbr.rel (%p229) target = $region48
        $region47: #{tpu_custom_call.1} parent=39 // pred_region
          %232 = dma.done [#allocation6], 512
        $region48: #{tpu_custom_call.1} parent=39 // pred_fallthru
          _
        %s233 = sand.u32 %s31, 1
        %s234 = scalar_lea.sflag [#allocation3], %s233
        %s235 = sand.u32 %s31, 1
        %s236 = smul.addr %s235, 8
        %s237 = scalar_lea.vmem [#allocation2], %s236
        %p238 = pneg %p44
        %p239 = pneg %p41
        %p240 = pneg %p65
        %p241 = pneg %p62
        %p242 = pneg %p86
        %p243 = pneg %p83
        %p244 = pneg %p107
        %p245 = pneg %p104
        %p246 = pneg %p128
        %p247 = pneg %p125
        %p248 = pneg %p154
        %p249 = pneg %p151
        %s250 = sand.u32 %s141, 1
        %s251 = scalar_lea.sflag [#allocation4], %s250
        %s252 = sand.u32 %s141, 1
        %s253 = smul.addr %s252, 8
        %s254 = scalar_lea.vmem [#allocation7], %s253
        %v255 = vld [vmem:[%s224] sm:$0xff]
        %v256 = vld [vmem:[#allocation5] sm:$0xff]
        %v257 = vld [vmem:[#allocation5 + $0x8] sm:$0xff]
        %v258 = vld [vmem:[#allocation5 + $0x10] sm:$0xff]
        %v259 = vld [vmem:[#allocation5 + $0x18] sm:$0xff]
        %v260 = vld [vmem:[%s2] sm:$0x1]
        %v262 = vlaneseq
        %v263 = vshrl.u32 %v262, 7
        %v264 = vsub.s32 0, %v263
        %v265 = vrot.slane %v260, %v264
        %vm267 = vcmask 261120
        %v269 = vsel %vm267, %v255, 0
        %271 = vmatprep.subr.mxu0 0.0
        %272 = vmatpush1.msra.mxu0 0.0
        %273 = vmatprep.subr.mxu0 0.0
        %274 = vmatpush1.msra.mxu0 0.0
        %275 = vmatprep.subr.mxu0 0.0
        %276 = vmatpush1.msra.mxu0 0.0
        %277 = vmatprep.subr.mxu0 0.0
        %278 = vmatpush1.msra.mxu0 0.0
        %279 = vmatprep.subr.mxu0 0.0
        %280 = vmatpush1.msra.mxu0 0.0
        %281 = vmatprep.subr.mxu0 0.0
        %282 = vmatpush1.msra.mxu0 0.0
        %283 = vmatprep.subr.mxu0 0.0
        %284 = vmatpush1.msra.mxu0 0.0
        %285 = vmatprep.subr.mxu0 0.0
        %286 = vmatpush1.msra.mxu0 0.0
        %287 = vmatprep.subr.mxu0 0.0
        %288 = vmatpush1.msra.mxu0 0.0
        %289 = vmatprep.subr.mxu0 0.0
        %290 = vmatpush1.msra.mxu0 0.0
        %291 = vmatprep.subr.mxu0 0.0
        %292 = vmatpush1.msra.mxu0 0.0
        %293 = vmatprep.subr.mxu0 0.0
        %294 = vmatpush1.msra.mxu0 0.0
        %295 = vmatprep.subr.mxu0 0.0
        %296 = vmatpush1.msra.mxu0 %v259
        %297 = vmatprep.subr.mxu0 0.0
        %298 = vmatpush1.msra.mxu0 %v258
        %299 = vmatprep.subr.mxu0 0.0
        %300 = vmatpush1.msra.mxu0 %v257
        %301 = vmatprep.subr.mxu0 0.0
        %302 = vmatpush1.msra.mxu0 %v256
        %303 = vmatprep.subr.mxu0 0.0
        %304 = vmatpush2.msra.mxu0 0.0
        %305 = vmatprep.subr.mxu0 0.0
        %306 = vmatpush2.msra.mxu0 0.0
        %307 = vmatprep.subr.mxu0 0.0
        %308 = vmatpush2.msra.mxu0 0.0
        %309 = vmatprep.subr.mxu0 0.0
        %310 = vmatpush2.msra.mxu0 0.0
        %311 = vmatprep.subr.mxu0 0.0
        %312 = vmatpush2.msra.mxu0 0.0
        %313 = vmatprep.subr.mxu0 0.0
        %314 = vmatpush2.msra.mxu0 0.0
        %315 = vmatprep.subr.mxu0 0.0
        %316 = vmatpush2.msra.mxu0 0.0
        %317 = vmatprep.subr.mxu0 0.0
        %318 = vmatpush2.msra.mxu0 0.0
        %319 = vmatprep.subr.mxu0 0.0
        %320 = vmatpush2.msra.mxu0 0.0
        %321 = vmatprep.subr.mxu0 0.0
        %322 = vmatpush2.msra.mxu0 0.0
        %323 = vmatprep.subr.mxu0 0.0
        %324 = vmatpush2.msra.mxu0 0.0
        %325 = vmatprep.subr.mxu0 0.0
        %326 = vmatpush2.msra.mxu0 0.0
        %327 = vmatprep.subr.mxu0 0.0
        %328 = vmatpush2.msra.mxu0 0.0
        %329 = vmatprep.subr.mxu0 0.0
        %330 = vmatpush2.msra.mxu0 0.0
        %331 = vmatprep.subr.mxu0 0.0
        %332 = vmatpush2.msra.mxu0 0.0
        %333 = vmatprep.subr.mxu0 0.0
        %334 = vmatpush2.msra.mxu0 0.0
        %335 = vmatprep.mubr.f32.mxu0 0.0
        %336 = vmatmul.mubr.f32.gmra.mxu0 %v269
        %v337 = vpop.f32.mrf.mxu0
        %v338 = vadd.f32 %v265, %v337
        %v339 = vpop.f32.mrf.mxu0
        %340 = vdwg.mxu0
        %v341 = vld [vmem:[%s3] sm:$0x1]
        %v342 = vld [vmem:[%s4] sm:$0x1]
        %343 = vadd.xlane.f32.xlu0 %v338
        %v344 = vpop.xlane.xlu0 %343
        %v345 = vmul.f32 %v344, 0.015625
        %v346 = vsub.f32 %v338, %v345
        %v347 = vlaneseq
        %v348 = vand.u32 %v347, 127
        %vm349 = vcmp.lt.s32.totalorder %v348, 64
        %v350 = vsel %vm349, 1, 0
        %vm351 = vcmp.eq.s32.totalorder %v350, 1
        %v352 = vsel %vm351, %v346, 0.0
        %v353 = vmul.f32 %v352, %v352
        %354 = vadd.xlane.f32.xlu0 %v353
        %v355 = vpop.xlane.xlu0 %354
        %v356 = vmul.f32 %v355, 0.015625
        %v357 = vadd.f32 %v356, 1e-05
        %v358 = vrsqrt.pop %v357
        %v359 = vmul.f32 %v352, %v358
        %v361 = vlaneseq
        %v362 = vshrl.u32 %v361, 7
        %v363 = vsub.s32 0, %v362
        %v364 = vrot.slane %v341, %v363
        %v366 = vmul.f32 %v359, %v364
        %v368 = vlaneseq
        %v369 = vshrl.u32 %v368, 7
        %v370 = vsub.s32 0, %v369
        %v371 = vrot.slane %v342, %v370
        %v373 = vadd.f32 %v366, %v371
        %v374 = vmax.f32 %v373, 0.0
        %375 = vst [vmem:[%s254] sm:$0xff] %v374
        %s376 = sand.u32 %s141, 1
        %s377 = scalar_lea.sflag [#allocation4], %s376
        %s378 = sand.u32 %s141, 1
        %s379 = smul.addr %s378, 8
        %s380 = scalar_lea.vmem [#allocation7], %s379
        // Predicated region
        $region49: #{tpu_custom_call.1} parent=39 // pred_check
          %p381 = pneg %p151
        $region50: #{tpu_custom_call.1} parent=39 // pred_check_branch
          %383 = sbr.rel (%p381) target = $region52
        $region51: #{tpu_custom_call.1} parent=39 // pred_region
          %s385 = ssub.s32 128, 128
          %386 = vsyncadd %s377, %s385
          %s387 = smul.addr %s23, 128
          %s388 = scalar_lea.hbm %s5, %s387
          %s390 = sshll.u32 %s380, 4
          %s391 = int_to_ptr.vmem [resolvable:$true] %s390
          %393 = dma.vmem_to_hbm [thread:$0]  %s391, 128, %s388, %s377
        $region52: #{tpu_custom_call.1} parent=39 // pred_fallthru
          _
      $region40: #{tpu_custom_call.1} parent=5 // pred_fallthru
        _
      %p394 = scmp.le.s32.totalorder 2, %s18
      // Predicated region
      $region53: #{tpu_custom_call.1} parent=5 // pred_check
        %p395 = pneg %p394
      $region54: #{tpu_custom_call.1} parent=5 // pred_check_branch
        %397 = sbr.rel (%p395) target = $region56
      $region55: #{tpu_custom_call.1} parent=5 // pred_region
        %s398 = ssub.s32 %s18, 2
        // Predicated region
        $region57: #{tpu_custom_call.1} parent=55 // pred_check
          %p399 = pneg %p157
        $region58: #{tpu_custom_call.1} parent=55 // pred_check_branch
          %401 = sbr.rel (%p399) target = $region60
        $region59: #{tpu_custom_call.1} parent=55 // pred_region
          %s402 = sand.u32 %s142, 1
          %s403 = scalar_lea.sflag [#allocation4], %s402
          %s404 = sand.u32 %s142, 1
          %s405 = smul.addr %s404, 8
          %s406 = scalar_lea.vmem [#allocation7], %s405
          %407 = dma.done %s403, 128
        $region60: #{tpu_custom_call.1} parent=55 // pred_fallthru
          _
      $region56: #{tpu_custom_call.1} parent=5 // pred_fallthru
        _
    $region6: #{tpu_custom_call.1} parent=1 // loop_footer
      %s22 = sadd.s32 1, %s18
    $region7: #{tpu_custom_call.1} parent=1 // loop_footer_branch
      %17 = sbr.rel target = $region3
    $region8: #{tpu_custom_call.1} parent=1 // loop_exit
      _
    %408 = vsyncpa [#allocation3], 1
    %s409 = scalar_lea.sflag [#allocation3], 1
    %410 = vsyncpa %s409, 1
    %411 = vsyncpa [#allocation6], 1
    %412 = vsyncpa [#allocation4], 1
    %s413 = scalar_lea.sflag [#allocation4], 1
    %414 = vsyncpa %s413, 1

</llo_original>
